<compile_context>
chip_gen: v5e
topology: v5e:2x2
jax: 0.10.0
libtpu: 0.0.40
codegen_flags: <defaults>
</compile_context>

<pallas_src>
import numpy as np

import jax
import jax.numpy as jnp
from jax.experimental import pallas as pl
from jax.experimental.pallas import tpu as pltpu

C_OUT = 16        # conv output channels
KSIZE = 5         # conv kernel size
PAD = KSIZE // 2  # conv padding (=2)
NUM_CLASSES = 3   # e.g. covid / pneumonia / normal

# Single-buffer grid-invariant inputs: their index_map is constant, so the
# default double-buffer is pure VMEM waste at the nominal 256x256 shape.
_SINGLE_BUFFER = {"pipeline_mode": pl.Buffered(1)} if hasattr(pl, "Buffered") else {}


# --------------------------------------------------------------------------
# Host-side (one-time) weight preparation: fold the 5x5 conv + column padding
# + even/odd output-column split into a single fused banded matmul slab
#   bmat : (KSIZE*W, 2*Wo*C_OUT)
# with row index (ky*W + c) and column blocks [even cols | odd cols], each
# block ordered (w, oc), so that
#   conv[h, w, oc] = ( xcat[h, :] @ bmat )[...]     with
#   xcat[h, ky*W + c] = xrow_pad[h + ky, c]
# --------------------------------------------------------------------------
def _banded_conv_weights(conv_w, W):
    wgt = conv_w.reshape(C_OUT, KSIZE, KSIZE)                 # (oc, ky, kx)
    c = np.arange(W)[None, :, None]
    w = np.arange(W)[None, None, :]
    kx = np.arange(KSIZE)[:, None, None]
    sel = (c == w + kx - PAD).astype(np.float32)              # (kx, c, w) 0/1 band
    # B[ky, c, w, oc] = sum_kx sel[kx, c, w] * wgt[oc, ky, kx]
    B = jnp.einsum("kcw,oyk->ycwo", jnp.asarray(sel), wgt)    # (KSIZE, W, W, C_OUT)
    Wo = W // 2
    WoC = Wo * C_OUT
    b_even = B[:, :, 0::2, :].reshape(KSIZE * W, WoC)         # even output columns
    b_odd = B[:, :, 1::2, :].reshape(KSIZE * W, WoC)          # odd  output columns
    return jnp.concatenate([b_even, b_odd], axis=1)           # (KSIZE*W, 2*WoC)


# --------------------------------------------------------------------------
# Kernel 1: Conv(1->16, k5, p2) + MaxPool2d(2) + ReLU, one image per grid step.
# Output layout per image: (Ho, Wo*C_OUT), lanes ordered (w, oc) -> lane dense.
# --------------------------------------------------------------------------
def _conv_pool_relu_kernel(bmat_ref, brow_ref, x_ref, o_ref, ybuf):
    _, H, W = x_ref.shape
    Ho = H // 2
    WoC = brow_ref.shape[1]

    # In-kernel zero padding of the rows (column padding lives in bmat).
    zrow = jnp.zeros((PAD, W), jnp.bfloat16)
    xh = jnp.concatenate([zrow, x_ref[0].astype(jnp.bfloat16), zrow], axis=0)

    # Lane-concatenate the KSIZE sublane-shifted row windows -> (H, KSIZE*W),
    # then ONE bf16 MXU matmul against the fused banded slab: the K reduction
    # accumulates inside the MXU (no per-tap f32 accumulator VMEM round-trips).
    xcat = jnp.concatenate([xh[ky:ky + H, :] for ky in range(KSIZE)], axis=1)
    acc = jnp.dot(xcat, bmat_ref[...],
                  preferred_element_type=jnp.float32)         # (H, 2*WoC) f32

    # 2x2 max-pool: width half = even/odd column slabs (lane-aligned slices);
    # height half = one sublane-strided read from a small f32 scratch
    # (kept: strided reads on refs are the proven lowering path).
    ybuf[...] = jnp.maximum(acc[:, :WoC], acc[:, WoC:])       # (H, WoC)
    pooled = jnp.maximum(ybuf[pl.ds(0, Ho, 2), :],
                         ybuf[pl.ds(1, Ho, 2), :])            # (Ho, WoC)
    o_ref[0] = jnp.maximum(pooled + brow_ref[...], 0.0).astype(o_ref.dtype)


def conv_pool_relu(x_nhw, bmat, bias_row):
    """x_nhw: (N, H, W) single-channel input -> (N, H/2, (W/2)*C_OUT) bf16."""
    N, H, W = x_nhw.shape
    assert H % 2 == 0 and W % 2 == 0
    Ho, Wo = H // 2, W // 2
    WoC = Wo * C_OUT
    return pl.pallas_call(
        _conv_pool_relu_kernel,
        out_shape=jax.ShapeDtypeStruct((N, Ho, WoC), jnp.bfloat16),
        grid_spec=pltpu.PrefetchScalarGridSpec(
            num_scalar_prefetch=0,
            grid=(N,),
            in_specs=[
                # fused bf16 banded weights: grid-invariant -> single-buffered
                pl.BlockSpec((KSIZE * W, 2 * WoC), lambda n: (0, 0),
                             **_SINGLE_BUFFER),
                # channel bias row: grid-invariant -> single-buffered
                pl.BlockSpec((1, WoC), lambda n: (0, 0), **_SINGLE_BUFFER),
                # one image per grid step (default double-buffered)
                pl.BlockSpec((1, H, W), lambda n: (n, 0, 0)),
            ],
            out_specs=pl.BlockSpec((1, Ho, WoC), lambda n: (n, 0, 0)),
            scratch_shapes=[pltpu.VMEM((H, WoC), jnp.float32)],  # pre-pool buffer
        ),
        compiler_params=pltpu.CompilerParams(
            dimension_semantics=("parallel",),        # batch independent -> megacore
            vmem_limit_bytes=28 * 1024 * 1024,        # fits v7x 64 MiB with bf16 slab
        ),
    )(bmat, bias_row, x_nhw)


# --------------------------------------------------------------------------
# Kernel 2: fc1 + ReLU + fc2 (partial logits), K-tiled over the fc1 reduction
# dim and split into two hidden-column halves on a leading "parallel" grid
# axis (one half per v7x TensorCore -> each core streams half of w1).
# feats / w1 stream in bf16; accumulation is f32 in a VMEM scratch.
# --------------------------------------------------------------------------
def _mlp_head_kernel(f_ref, w1_ref, b1_ref, w2_ref, o_ref, acc_ref):
    k = pl.program_id(1)

    @pl.when(k == 0)
    def _():
        acc_ref[...] = jnp.zeros_like(acc_ref)

    acc_ref[...] += jnp.dot(f_ref[...], w1_ref[...],
                            preferred_element_type=jnp.float32)

    @pl.when(k == pl.num_programs(1) - 1)
    def _():
        h = jnp.maximum(acc_ref[...] + b1_ref[...], 0.0)
        o_ref[0] = jnp.dot(h, w2_ref[...], preferred_element_type=jnp.float32)


def _fc1_k_tile(F):
    # Largest lane-aligned tile dividing F that still gives >=2 K-steps.
    # Cap raised to 16384 (8 MiB double-buffered bf16 w1 half-column blocks)
    # so per-step DMA dwarfs the ~0.35 us fixed per-step overhead.
    for tk in (16384, 8192, 4096, 2048, 1024, 512, 256, 128):
        if F % tk == 0 and F // tk >= 2:
            return tk
    return F


def mlp_head_partial(feats, w1, b1, w2):
    """Returns partial logits of shape (2, N, C): sum the halves, add b2,
    log_softmax outside (tiny)."""
    N, F = feats.shape
    HID = w1.shape[1]
    C = w2.shape[1]
    assert HID % 2 == 0 and (HID // 2) % 128 == 0
    Hh = HID // 2
    tk = _fc1_k_tile(F)
    return pl.pallas_call(
        _mlp_head_kernel,
        out_shape=jax.ShapeDtypeStruct((2, N, C), jnp.float32),
        grid_spec=pltpu.PrefetchScalarGridSpec(
            num_scalar_prefetch=0,
            grid=(2, F // tk),                               # (hidden half, K tile)
            in_specs=[
                pl.BlockSpec((N, tk), lambda h, k: (0, k)),   # bf16 feature stream
                pl.BlockSpec((tk, Hh), lambda h, k: (k, h)),  # bf16 w1 half-column stream
                pl.BlockSpec((1, Hh), lambda h, k: (0, h)),   # b1 half
                pl.BlockSpec((Hh, C), lambda h, k: (h, 0)),   # w2 row half
            ],
            out_specs=pl.BlockSpec((1, N, C), lambda h, k: (h, 0, 0)),
            scratch_shapes=[pltpu.VMEM((N, Hh), jnp.float32)],  # fc1 half accumulator
        ),
        compiler_params=pltpu.CompilerParams(
            dimension_semantics=("parallel", "arbitrary"),    # halves across TCs, K reduction
            vmem_limit_bytes=32 * 1024 * 1024,
        ),
    )(feats, w1, b1, w2)


# --------------------------------------------------------------------------
# One-time weight preparation (hoisted OUT of the jitted forward so the
# banded-slab build and the 128+ MiB w1 permutation never run per call).
# --------------------------------------------------------------------------
def prepare_params(conv_w, conv_b, w1, b1, w2, b2, H, W):
    Ho, Wo = H // 2, W // 2
    hidden = w1.shape[1]
    bmat = _banded_conv_weights(conv_w, W).astype(jnp.bfloat16)
    bias_row = jnp.tile(conv_b, Wo)[None, :].astype(jnp.float32)  # lanes ordered (w, oc)
    # fc1 rows come in PyTorch NCHW-flatten order; permute once to the NHWC
    # order the conv kernel emits (no in-kernel transpose, no per-call cost).
    w1_nhwc = (w1.reshape(C_OUT, Ho, Wo, hidden)
                 .transpose(1, 2, 0, 3)
                 .reshape(Ho * Wo * C_OUT, hidden)).astype(jnp.bfloat16)
    return dict(bmat=bmat, bias_row=bias_row, w1=w1_nhwc,
                b1=jnp.asarray(b1, jnp.float32),
                w2=jnp.asarray(w2, jnp.float32),
                b2=jnp.asarray(b2, jnp.float32))


# --------------------------------------------------------------------------
# Full forward pass (mirrors BaselineConvCOVIDDetector.forward)
# --------------------------------------------------------------------------
@jax.jit
def forward(x, params):
    N = x.shape[0]
    pooled = conv_pool_relu(x[:, 0], params["bmat"], params["bias_row"])
    feats = pooled.reshape(N, -1)                     # NHWC flatten, bf16
    partial = mlp_head_partial(feats, params["w1"], params["b1"], params["w2"])
    # Tiny (2, N, C) cross-half combine + bias + log_softmax in plain JAX.
    logits = partial[0] + partial[1] + params["b2"]
    z = logits - jnp.max(logits, axis=-1, keepdims=True)
    return z - jnp.log(jnp.sum(jnp.exp(z), axis=-1, keepdims=True))


# Pure-JAX reference (correctness check only)
def reference(x, conv_w, conv_b, w1, b1, w2, b2):
    y = jax.lax.conv_general_dilated(
        x, conv_w, window_strides=(1, 1), padding=((PAD, PAD), (PAD, PAD)),
        dimension_numbers=("NCHW", "OIHW", "NCHW"),
        precision=jax.lax.Precision.HIGHEST)
    y = y + conv_b[None, :, None, None]
    y = jax.lax.reduce_window(y, -jnp.inf, jax.lax.max,
                              (1, 1, 2, 2), (1, 1, 2, 2), "VALID")
    y = jnp.maximum(y, 0.0)
    f = y.reshape(y.shape[0], -1)
    h = jnp.maximum(jnp.dot(f, w1, precision=jax.lax.Precision.HIGHEST) + b1, 0.0)
    logits = jnp.dot(h, w2, precision=jax.lax.Precision.HIGHEST) + b2
    return jax.nn.log_softmax(logits, axis=1)


if __name__ == "__main__":
    # Note: the original module hardcodes fc1 in_features = 16*128*128 (a
    # 256x256 input).  We keep the structural relation F = 16*(H/2)*(W/2) but
    # run a small 16x16 demo so the script is fast.
    N, H, W = 2, 16, 16
    Ho, Wo = H // 2, W // 2
    F = C_OUT * Ho * Wo            # 1024
    HIDDEN = 256

    key = jax.random.PRNGKey(0)
    ks = jax.random.split(key, 7)
    x = jax.random.normal(ks[0], (N, 1, H, W), jnp.float32)
    conv_w = jax.random.normal(ks[1], (C_OUT, 1, KSIZE, KSIZE), jnp.float32) * 0.1
    conv_b = jax.random.normal(ks[2], (C_OUT,), jnp.float32) * 0.1
    w1 = jax.random.normal(ks[3], (F, HIDDEN), jnp.float32) * (1.0 / jnp.sqrt(F))
    b1 = jax.random.normal(ks[4], (1, HIDDEN), jnp.float32) * 0.01
    w2 = jax.random.normal(ks[5], (HIDDEN, NUM_CLASSES), jnp.float32) * (1.0 / 16.0)
    b2 = jax.random.normal(ks[6], (1, NUM_CLASSES), jnp.float32) * 0.01

    params = prepare_params(conv_w, conv_b, w1, b1, w2, b2, H, W)  # one-time prep
    out = jax.block_until_ready(forward(x, params))

    ref = reference(x, conv_w, conv_b, w1, b1, w2, b2)
    assert out.shape == (N, NUM_CLASSES)
    assert float(jnp.max(jnp.abs(out - ref))) < 5e-2, "mismatch vs pure-JAX reference"
    print("KERNEL_OK")
</pallas_src>

<mosaic_0001>
module attributes {stable_mosaic.version = 11 : i64} {
  func.func @_conv_pool_relu_kernel(%arg0: i32, %arg1: memref<80x256xbf16, #tpu.memory_space<vmem>>, %arg2: memref<1x128xf32, #tpu.memory_space<vmem>>, %arg3: memref<1x16x16xf32, #tpu.memory_space<vmem>>, %arg4: memref<1x8x128xbf16, #tpu.memory_space<vmem>>, %arg5: memref<16x128xf32, #tpu.memory_space<vmem>>) attributes {dimension_semantics = [#tpu.dimension_semantics<parallel>], iteration_bounds = array<i64: 2>, scalar_prefetch = 0 : i64, scratch_operands = 1 : i64, tpu.core_type = #tpu.core_type<tc>, window_params = [{pipeline_mode = #tpu.pipeline_mode<synchronous>, transform_indices = @transform_0, window_bounds = array<i64: 80, 256>}, {pipeline_mode = #tpu.pipeline_mode<synchronous>, transform_indices = @transform_1, window_bounds = array<i64: 1, 128>}, {transform_indices = @transform_2, window_bounds = array<i64: 1, 16, 16>}, {transform_indices = @transform_3, window_bounds = array<i64: 1, 8, 128>}]} {
    %cst = arith.constant 0.000000e+00 : bf16
    %0 = vector.broadcast %cst : bf16 to vector<2x16xbf16>
    %c0 = arith.constant 0 : index
    %c0_0 = arith.constant 0 : index
    %c0_1 = arith.constant 0 : index
    %1 = vector.load %arg3[%c0, %c0_0, %c0_1] : memref<1x16x16xf32, #tpu.memory_space<vmem>>, vector<1x16x16xf32>
    %2 = vector.shape_cast %1 : vector<1x16x16xf32> to vector<16x16xf32>
    %3 = arith.truncf %2 : vector<16x16xf32> to vector<16x16xbf16>
    %4 = tpu.concatenate %0, %3, %0 in 0 : vector<2x16xbf16>, vector<16x16xbf16>, vector<2x16xbf16> -> vector<20x16xbf16>
    %5 = vector.extract_strided_slice %4 {offsets = [0, 0], sizes = [16, 16], strides = [1, 1]} : vector<20x16xbf16> to vector<16x16xbf16>
    %6 = vector.extract_strided_slice %4 {offsets = [1, 0], sizes = [16, 16], strides = [1, 1]} : vector<20x16xbf16> to vector<16x16xbf16>
    %7 = vector.extract_strided_slice %4 {offsets = [2, 0], sizes = [16, 16], strides = [1, 1]} : vector<20x16xbf16> to vector<16x16xbf16>
    %8 = vector.extract_strided_slice %4 {offsets = [3, 0], sizes = [16, 16], strides = [1, 1]} : vector<20x16xbf16> to vector<16x16xbf16>
    %9 = vector.extract_strided_slice %4 {offsets = [4, 0], sizes = [16, 16], strides = [1, 1]} : vector<20x16xbf16> to vector<16x16xbf16>
    %10 = tpu.concatenate %5, %6, %7, %8, %9 in 1 : vector<16x16xbf16>, vector<16x16xbf16>, vector<16x16xbf16>, vector<16x16xbf16>, vector<16x16xbf16> -> vector<16x80xbf16>
    %c0_2 = arith.constant 0 : index
    %c0_3 = arith.constant 0 : index
    %11 = vector.load %arg1[%c0_2, %c0_3] : memref<80x256xbf16, #tpu.memory_space<vmem>>, vector<80x256xbf16>
    %cst_4 = arith.constant dense<0.000000e+00> : vector<16x256xf32>
    %12 = tpu.matmul %10, %11, %cst_4 {dimension_numbers = #tpu.dot_dimension_numbers<[1], [0], [0], [1], [0, 0, 1, 1], [], []>} : vector<16x80xbf16>, vector<80x256xbf16>, vector<16x256xf32> -> vector<16x256xf32>
    %13 = vector.extract_strided_slice %12 {offsets = [0, 0], sizes = [16, 128], strides = [1, 1]} : vector<16x256xf32> to vector<16x128xf32>
    %14 = vector.extract_strided_slice %12 {offsets = [0, 128], sizes = [16, 128], strides = [1, 1]} : vector<16x256xf32> to vector<16x128xf32>
    %15 = arith.maximumf %13, %14 : vector<16x128xf32>
    %c0_5 = arith.constant 0 : index
    %c0_6 = arith.constant 0 : index
    %16 = vector.load %arg5[%c0_5, %c0_6] : memref<16x128xf32, #tpu.memory_space<vmem>>, vector<16x128xf32>
    tpu.vector_store %arg5[%c0_5, %c0_6], %15 {strides = array<i32>} : memref<16x128xf32, #tpu.memory_space<vmem>>, vector<16x128xf32>,
    %c0_7 = arith.constant 0 : index
    %c0_8 = arith.constant 0 : index
    %17 = tpu.strided_load %arg5[%c0_7, %c0_8] {strides = array<i32: 2, 1>} : memref<16x128xf32, #tpu.memory_space<vmem>>, vector<8x128xf32>
    %c1 = arith.constant 1 : index
    %c0_9 = arith.constant 0 : index
    %18 = tpu.strided_load %arg5[%c1, %c0_9] {strides = array<i32: 2, 1>} : memref<16x128xf32, #tpu.memory_space<vmem>>, vector<8x128xf32>
    %19 = arith.maximumf %17, %18 : vector<8x128xf32>
    %c0_10 = arith.constant 0 : index
    %c0_11 = arith.constant 0 : index
    %20 = vector.load %arg2[%c0_10, %c0_11] : memref<1x128xf32, #tpu.memory_space<vmem>>, vector<1x128xf32>
    %21 = vector.broadcast %20 : vector<1x128xf32> to vector<8x128xf32>
    %22 = arith.addf %19, %21 : vector<8x128xf32>
    %cst_12 = arith.constant 0.000000e+00 : f32
    %23 = vector.broadcast %cst_12 : f32 to vector<8x128xf32>
    %24 = arith.maximumf %22, %23 : vector<8x128xf32>
    %25 = arith.truncf %24 : vector<8x128xf32> to vector<8x128xbf16>
    %c0_13 = arith.constant 0 : index
    %c0_14 = arith.constant 0 : index
    %c0_15 = arith.constant 0 : index
    %26 = vector.load %arg4[%c0_13, %c0_14, %c0_15] : memref<1x8x128xbf16, #tpu.memory_space<vmem>>, vector<1x8x128xbf16>
    %27 = vector.shape_cast %26 : vector<1x8x128xbf16> to vector<8x128xbf16>
    %28 = vector.shape_cast %25 : vector<8x128xbf16> to vector<1x8x128xbf16>
    tpu.vector_store %arg4[%c0_13, %c0_14, %c0_15], %28 {strides = array<i32>} : memref<1x8x128xbf16, #tpu.memory_space<vmem>>, vector<1x8x128xbf16>,
    return
  }
  func.func @transform_0(%arg0: i32) -> (i32, i32) {
    %c0_i32 = arith.constant 0 : i32
    %c0_i32_0 = arith.constant 0 : i32
    %c0_i32_1 = arith.constant 0 : i32
    return %c0_i32, %c0_i32_0 : i32, i32
  }
  func.func @transform_1(%arg0: i32) -> (i32, i32) {
    %c0_i32 = arith.constant 0 : i32
    %c0_i32_0 = arith.constant 0 : i32
    %c0_i32_1 = arith.constant 0 : i32
    return %c0_i32, %c0_i32_0 : i32, i32
  }
  func.func @transform_2(%arg0: i32) -> (i32, i32, i32) {
    %c0_i32 = arith.constant 0 : i32
    %c0_i32_0 = arith.constant 0 : i32
    %c0_i32_1 = arith.constant 0 : i32
    return %arg0, %c0_i32, %c0_i32_0 : i32, i32, i32
  }
  func.func @transform_3(%arg0: i32) -> (i32, i32, i32) {
    %c0_i32 = arith.constant 0 : i32
    %c0_i32_0 = arith.constant 0 : i32
    %c0_i32_1 = arith.constant 0 : i32
    return %arg0, %c0_i32, %c0_i32_0 : i32, i32, i32
  }
}

module attributes {stable_mosaic.version = 11 : i64} {
  func.func @_mlp_head_kernel(%arg0: i32, %arg1: i32, %arg2: memref<2x512xbf16, #tpu.memory_space<vmem>>, %arg3: memref<512x128xbf16, #tpu.memory_space<vmem>>, %arg4: memref<1x128xf32, #tpu.memory_space<vmem>>, %arg5: memref<128x3xf32, #tpu.memory_space<vmem>>, %arg6: memref<1x2x3xf32, #tpu.memory_space<vmem>>, %arg7: memref<2x128xf32, #tpu.memory_space<vmem>>) attributes {dimension_semantics = [#tpu.dimension_semantics<parallel>, #tpu.dimension_semantics<arbitrary>], iteration_bounds = array<i64: 2, 2>, scalar_prefetch = 0 : i64, scratch_operands = 1 : i64, tpu.core_type = #tpu.core_type<tc>, window_params = [{transform_indices = @transform_0, window_bounds = array<i64: 2, 512>}, {transform_indices = @transform_1, window_bounds = array<i64: 512, 128>}, {transform_indices = @transform_2, window_bounds = array<i64: 1, 128>}, {transform_indices = @transform_3, window_bounds = array<i64: 128, 3>}, {transform_indices = @transform_4, window_bounds = array<i64: 1, 2, 3>}]} {
    %c0_i32 = arith.constant 0 : i32
    %0 = arith.cmpi eq, %arg1, %c0_i32 : i32
    %1 = arith.extui %0 : i1 to i32
    %c0_i32_0 = arith.constant 0 : i32
    %2 = arith.cmpi ne, %1, %c0_i32_0 : i32
    scf.if %2 {
      %cst_9 = arith.constant 0.000000e+00 : f32
      %12 = vector.broadcast %cst_9 : f32 to vector<2x128xf32>
      %c0_10 = arith.constant 0 : index
      %c0_11 = arith.constant 0 : index
      %13 = vector.load %arg7[%c0_10, %c0_11] : memref<2x128xf32, #tpu.memory_space<vmem>>, vector<2x128xf32>
      tpu.vector_store %arg7[%c0_10, %c0_11], %12 {strides = array<i32>} : memref<2x128xf32, #tpu.memory_space<vmem>>, vector<2x128xf32>,
    } else {
    }
    %c0 = arith.constant 0 : index
    %c0_1 = arith.constant 0 : index
    %3 = vector.load %arg7[%c0, %c0_1] : memref<2x128xf32, #tpu.memory_space<vmem>>, vector<2x128xf32>
    %c0_2 = arith.constant 0 : index
    %c0_3 = arith.constant 0 : index
    %4 = vector.load %arg2[%c0_2, %c0_3] : memref<2x512xbf16, #tpu.memory_space<vmem>>, vector<2x512xbf16>
    %c0_4 = arith.constant 0 : index
    %c0_5 = arith.constant 0 : index
    %5 = vector.load %arg3[%c0_4, %c0_5] : memref<512x128xbf16, #tpu.memory_space<vmem>>, vector<512x128xbf16>
    %cst = arith.constant dense<0.000000e+00> : vector<2x128xf32>
    %6 = tpu.matmul %4, %5, %cst {dimension_numbers = #tpu.dot_dimension_numbers<[1], [0], [0], [1], [0, 0, 1, 1], [], []>} : vector<2x512xbf16>, vector<512x128xbf16>, vector<2x128xf32> -> vector<2x128xf32>
    %7 = arith.addf %3, %6 : vector<2x128xf32>
    %c0_6 = arith.constant 0 : index
    %c0_7 = arith.constant 0 : index
    %8 = vector.load %arg7[%c0_6, %c0_7] : memref<2x128xf32, #tpu.memory_space<vmem>>, vector<2x128xf32>
    tpu.vector_store %arg7[%c0_6, %c0_7], %7 {strides = array<i32>} : memref<2x128xf32, #tpu.memory_space<vmem>>, vector<2x128xf32>,
    %c1_i32 = arith.constant 1 : i32
    %9 = arith.cmpi eq, %arg1, %c1_i32 : i32
    %10 = arith.extui %9 : i1 to i32
    %c0_i32_8 = arith.constant 0 : i32
    %11 = arith.cmpi ne, %10, %c0_i32_8 : i32
    scf.if %11 {
      %c0_9 = arith.constant 0 : index
      %c0_10 = arith.constant 0 : index
      %12 = vector.load %arg7[%c0_9, %c0_10] : memref<2x128xf32, #tpu.memory_space<vmem>>, vector<2x128xf32>
      %c0_11 = arith.constant 0 : index
      %c0_12 = arith.constant 0 : index
      %13 = vector.load %arg4[%c0_11, %c0_12] : memref<1x128xf32, #tpu.memory_space<vmem>>, vector<1x128xf32>
      %14 = vector.broadcast %13 : vector<1x128xf32> to vector<2x128xf32>
      %15 = arith.addf %12, %14 : vector<2x128xf32>
      %cst_13 = arith.constant 0.000000e+00 : f32
      %16 = vector.broadcast %cst_13 : f32 to vector<2x128xf32>
      %17 = arith.maximumf %15, %16 : vector<2x128xf32>
      %c0_14 = arith.constant 0 : index
      %c0_15 = arith.constant 0 : index
      %18 = vector.load %arg5[%c0_14, %c0_15] : memref<128x3xf32, #tpu.memory_space<vmem>>, vector<128x3xf32>
      %cst_16 = arith.constant dense<0.000000e+00> : vector<2x3xf32>
      %19 = tpu.matmul %17, %18, %cst_16 {dimension_numbers = #tpu.dot_dimension_numbers<[1], [0], [0], [1], [0, 0, 1, 1], [], []>} : vector<2x128xf32>, vector<128x3xf32>, vector<2x3xf32> -> vector<2x3xf32>
      %c0_17 = arith.constant 0 : index
      %c0_18 = arith.constant 0 : index
      %c0_19 = arith.constant 0 : index
      %20 = vector.load %arg6[%c0_17, %c0_18, %c0_19] : memref<1x2x3xf32, #tpu.memory_space<vmem>>, vector<1x2x3xf32>
      %21 = vector.shape_cast %20 : vector<1x2x3xf32> to vector<2x3xf32>
      %22 = vector.shape_cast %19 : vector<2x3xf32> to vector<1x2x3xf32>
      tpu.vector_store %arg6[%c0_17, %c0_18, %c0_19], %22 {strides = array<i32>} : memref<1x2x3xf32, #tpu.memory_space<vmem>>, vector<1x2x3xf32>,
    } else {
    }
    return
  }
  func.func @transform_0(%arg0: i32, %arg1: i32) -> (i32, i32) {
    %c0_i32 = arith.constant 0 : i32
    %c0_i32_0 = arith.constant 0 : i32
    return %c0_i32, %arg1 : i32, i32
  }
  func.func @transform_1(%arg0: i32, %arg1: i32) -> (i32, i32) {
    %c0_i32 = arith.constant 0 : i32
    return %arg1, %arg0 : i32, i32
  }
  func.func @transform_2(%arg0: i32, %arg1: i32) -> (i32, i32) {
    %c0_i32 = arith.constant 0 : i32
    %c0_i32_0 = arith.constant 0 : i32
    return %c0_i32, %arg0 : i32, i32
  }
  func.func @transform_3(%arg0: i32, %arg1: i32) -> (i32, i32) {
    %c0_i32 = arith.constant 0 : i32
    %c0_i32_0 = arith.constant 0 : i32
    return %arg0, %c0_i32 : i32, i32
  }
  func.func @transform_4(%arg0: i32, %arg1: i32) -> (i32, i32, i32) {
    %c0_i32 = arith.constant 0 : i32
    %c0_i32_0 = arith.constant 0 : i32
    %c0_i32_1 = arith.constant 0 : i32
    return %arg0, %c0_i32, %c0_i32_0 : i32, i32, i32
  }
}

</mosaic_0001>

<llo_original>
// kernel: forward.2
$region0: #{forward.2}
  #allocation0 [shape = 'u32[]', space=smem, size = 0x4, offset = 0x4, fixed_abs, tag = 'smem constant byte address 0x4 - core index']
  #allocation1 [shape = 'u32[72,128]{1,0:T(1,128)}', space=vmem, size = 0x9000, scoped, tag = 'internal scratch']
  #allocation2 [shape = 'f32[16,128]{1,0:T(8,128)}', space=vmem, size = 0x2000, scoped, tag = 'scratch operand']
  %s0 = inlined_call_operand.hbm [shape: bf16[80,256], index: 0, kind: input, shape index: {}]
  %s1 = inlined_call_operand.vmem [shape: f32[1,128], index: 1, kind: input, shape index: {}]
  %s2 = inlined_call_operand.hbm [shape: f32[2,16,16], index: 2, kind: input, shape index: {}]
  %s3 = inlined_call_operand.vmem [shape: bf16[2,8,128], index: 3, kind: output, shape index: {}]
  %s4 = sld [smem:[#allocation0]]
  $region53: #{forward.2} parent=0
    _
  %s6 = ssub.s32 1, %s4
  %s7 = scalar_select 0, %s6, %s4
  $region1: #{forward.2} parent=0
    #allocation3 [shape = 'u8[40960]{0}', space=vmem, size = 0xa000, scoped, tag = 'input window, operand 0, single buffered']
    #allocation4 [shape = 's32[2]{0}', space=sflag, size = 0x8, scoped, tag = 'scoped memory for forward.2']
    #allocation5 [shape = 'u8[16384]{0}', space=vmem, size = 0x4000, scoped, tag = 'input window, operand 2']
    #allocation6 [shape = 's32[2]{0}', space=sflag, size = 0x8, scoped, tag = 'scoped memory for forward.2']
    %8 = vsyncpa [#allocation4], 0
    %9 = vsyncpa [#allocation6], 0
    %s10 = scalar_lea.sflag [#allocation6], 1
    %11 = vsyncpa %s10, 0
    loop: start=0, step=1, limit=4
    $region2: #{forward.2} parent=1 // loop_pre_header
      _
    $region3: #{forward.2} parent=1 // loop_header
      %s13 = sphi 0, %s17
      %p14 = scmp.ge.s32.totalorder %s13, 4
      %s21 = sphi 0, %s21
      %s23 = sphi 0, %s21
      %s24 = sphi 0, %s23
      %s38 = sphi 0, %s24
      %s42 = sphi 0, %s42
      %s44 = sphi 0, %s42
      %s45 = sphi 0, %s44
      %s59 = sphi 0, %s45
      %s65 = sphi 0, %s67
      %s68 = sphi 0, %s65
      %s69 = sphi 0, %s68
      %s85 = sphi 0, %s69
      %s91 = sphi 0, %s93
      %s94 = sphi 0, %s91
      %s95 = sphi 0, %s94
      %s111 = sphi 0, %s95
    $region4: #{forward.2} parent=1 // loop_header_branch
      %16 = sbr.rel (%p14) target = $region8
    $region5: #{forward.2} parent=1 // loop_body
      %s18 = ssub.s32 %s13, 1
      %s19 = ssub.s32 %s13, 2
      %s20 = sadd.s32 %s13, 1
      %s22 = sadd.s32 %s21, 1
      %p25 = scmp.eq.s32.totalorder %s13, 1
      %p26 = scmp.ne.s32.totalorder %s21, %s23
      %p27 = scmp.eq.s32.totalorder %s13, 0
      %p28 = por %p26, %p27
      %p29 = scmp.ne.s32.totalorder %s21, %s23
      %p30 = scmp.eq.s32.totalorder %s18, 1
      %p31 = por %p29, %p30
      %p32 = scmp.ne.s32.totalorder %s23, %s24
      %p33 = scmp.eq.s32.totalorder %s18, 0
      %p34 = por %p32, %p33
      %p35 = scmp.ne.s32.totalorder %s23, %s24
      %p36 = scmp.eq.s32.totalorder %s19, 1
      %p37 = por %p35, %p36
      %p39 = scmp.ne.s32.totalorder %s24, %s38
      %p40 = scmp.eq.s32.totalorder %s19, 0
      %p41 = por %p39, %p40
      %s43 = sadd.s32 %s42, 1
      %p46 = scmp.eq.s32.totalorder %s13, 1
      %p47 = scmp.ne.s32.totalorder %s42, %s44
      %p48 = scmp.eq.s32.totalorder %s13, 0
      %p49 = por %p47, %p48
      %p50 = scmp.ne.s32.totalorder %s42, %s44
      %p51 = scmp.eq.s32.totalorder %s18, 1
      %p52 = por %p50, %p51
      %p53 = scmp.ne.s32.totalorder %s44, %s45
      %p54 = scmp.eq.s32.totalorder %s18, 0
      %p55 = por %p53, %p54
      %p56 = scmp.ne.s32.totalorder %s44, %s45
      %p57 = scmp.eq.s32.totalorder %s19, 1
      %p58 = por %p56, %p57
      %p60 = scmp.ne.s32.totalorder %s45, %s59
      %p61 = scmp.eq.s32.totalorder %s19, 0
      %p62 = por %p60, %p61
      %s63 = ssub.s32 %s13, %s20
      %p64 = scmp.eq.s32.totalorder %s63, 0
      %s66 = sadd.s32 %s65, 1
      %s67 = scalar_select %p64, %s65, %s66
      %p70 = pneg %p64
      %p71 = scmp.eq.s32.totalorder %s13, 1
      %p72 = por %p70, %p71
      %p73 = scmp.ne.s32.totalorder %s65, %s68
      %p74 = scmp.eq.s32.totalorder %s13, 0
      %p75 = por %p73, %p74
      %p76 = scmp.ne.s32.totalorder %s65, %s68
      %p77 = scmp.eq.s32.totalorder %s18, 1
      %p78 = por %p76, %p77
      %p79 = scmp.ne.s32.totalorder %s68, %s69
      %p80 = scmp.eq.s32.totalorder %s18, 0
      %p81 = por %p79, %p80
      %p82 = scmp.ne.s32.totalorder %s68, %s69
      %p83 = scmp.eq.s32.totalorder %s19, 1
      %p84 = por %p82, %p83
      %p86 = scmp.ne.s32.totalorder %s69, %s85
      %p87 = scmp.eq.s32.totalorder %s19, 0
      %p88 = por %p86, %p87
      %s89 = ssub.s32 %s13, %s20
      %p90 = scmp.eq.s32.totalorder %s89, 0
      %s92 = sadd.s32 %s91, 1
      %s93 = scalar_select %p90, %s91, %s92
      %p96 = pneg %p90
      %p97 = scmp.eq.s32.totalorder %s13, 1
      %p98 = por %p96, %p97
      %p99 = scmp.ne.s32.totalorder %s91, %s94
      %p100 = scmp.eq.s32.totalorder %s13, 0
      %p101 = por %p99, %p100
      %p102 = scmp.ne.s32.totalorder %s91, %s94
      %p103 = scmp.eq.s32.totalorder %s18, 1
      %p104 = por %p102, %p103
      %p105 = scmp.ne.s32.totalorder %s94, %s95
      %p106 = scmp.eq.s32.totalorder %s18, 0
      %p107 = por %p105, %p106
      %p108 = scmp.ne.s32.totalorder %s94, %s95
      %p109 = scmp.eq.s32.totalorder %s19, 1
      %p110 = por %p108, %p109
      %p112 = scmp.ne.s32.totalorder %s95, %s111
      %p113 = scmp.eq.s32.totalorder %s19, 0
      %p114 = por %p112, %p113
      %p115 = scmp.le.s32.totalorder 1, %s13
      %p116 = scmp.lt.s32.totalorder %s13, 3
      %p117 = pnand %p115, %p116
      %p118 = pneg %p117
      // Predicated region
      $region9: #{forward.2} parent=5 // pred_check
        _
      $region10: #{forward.2} parent=5 // pred_check_branch
        %120 = sbr.rel (%p117) target = $region12
      $region11: #{forward.2} parent=5 // pred_region
        %s121 = ssub.s32 %s13, 1
        // Predicated region
        $region13: #{forward.2} parent=11 // pred_check
          %p122 = pneg %p34
        $region14: #{forward.2} parent=11 // pred_check_branch
          %124 = sbr.rel (%p122) target = $region16
        $region15: #{forward.2} parent=11 // pred_region
          %126 = vsyncadd [#allocation4], 0
          %s127 = sshll.u32 %s0, 4
          %s128 = int_to_ptr.hbm [resolvable:$true] %s127
          %s129 = sshll.u32 [#allocation3], 4
          %s130 = int_to_ptr.vmem [resolvable:$true] %s129
          %135 = dma.hbm_to_vmem [thread:$0]  %s128, 1280, %s130, [#allocation4], 128, 128, 8
        $region16: #{forward.2} parent=11 // pred_fallthru
          _
        // Predicated region
        $region17: #{forward.2} parent=11 // pred_check
          %p136 = pneg %p55
        $region18: #{forward.2} parent=11 // pred_check_branch
          %138 = sbr.rel (%p136) target = $region20
        $region19: #{forward.2} parent=11 // pred_region
          _
        $region20: #{forward.2} parent=11 // pred_fallthru
          _
      $region12: #{forward.2} parent=5 // pred_fallthru
        _
      %p139 = scmp.lt.s32.totalorder %s13, 2
      // Predicated region
      $region21: #{forward.2} parent=5 // pred_check
        %p140 = pneg %p139
      $region22: #{forward.2} parent=5 // pred_check_branch
        %142 = sbr.rel (%p140) target = $region24
      $region23: #{forward.2} parent=5 // pred_region
        // Predicated region
        $region25: #{forward.2} parent=23 // pred_check
          %p143 = pneg %p75
        $region26: #{forward.2} parent=23 // pred_check_branch
          %145 = sbr.rel (%p143) target = $region28
        $region27: #{forward.2} parent=23 // pred_region
          %s146 = sand.u32 %s65, 1
          %s147 = scalar_lea.sflag [#allocation6], %s146
          %s148 = sand.u32 %s65, 1
          %s149 = smul.addr %s148, 16
          %s150 = scalar_lea.vmem [#allocation5], %s149
          %152 = vsyncadd %s147, 0
          %s153 = smul.addr %s13, 2
          %s154 = smul.addr %s153, 8
          %s155 = scalar_lea.hbm %s2, %s154
          %s156 = sshll.u32 %s155, 4
          %s157 = int_to_ptr.hbm [resolvable:$true] %s156
          %s158 = sshll.u32 %s150, 4
          %s159 = int_to_ptr.vmem [resolvable:$true] %s158
          %164 = dma.hbm_to_vmem [thread:$0]  %s157, 256, %s159, %s147, 128, 128, 8
        $region28: #{forward.2} parent=23 // pred_fallthru
          _
      $region24: #{forward.2} parent=5 // pred_fallthru
        _
      %p165 = scmp.le.s32.totalorder 1, %s13
      %p166 = scmp.lt.s32.totalorder %s13, 3
      %p167 = pnand %p165, %p166
      %p168 = pneg %p167
      // Predicated region
      $region29: #{forward.2} parent=5 // pred_check
        _
      $region30: #{forward.2} parent=5 // pred_check_branch
        %170 = sbr.rel (%p167) target = $region32
      $region31: #{forward.2} parent=5 // pred_region
        %s171 = ssub.s32 %s13, 1
        // Predicated region
        $region33: #{forward.2} parent=31 // pred_check
          %p172 = pneg %p34
        $region34: #{forward.2} parent=31 // pred_check_branch
          %174 = sbr.rel (%p172) target = $region36
        $region35: #{forward.2} parent=31 // pred_region
          %176 = dma.done [#allocation4], 1280
        $region36: #{forward.2} parent=31 // pred_fallthru
          _
        %s177 = sand.u32 %s68, 1
        %s178 = scalar_lea.sflag [#allocation6], %s177
        %s179 = sand.u32 %s68, 1
        %s180 = smul.addr %s179, 16
        %s181 = scalar_lea.vmem [#allocation5], %s180
        // Predicated region
        $region37: #{forward.2} parent=31 // pred_check
          %p182 = pneg %p81
        $region38: #{forward.2} parent=31 // pred_check_branch
          %184 = sbr.rel (%p182) target = $region40
        $region39: #{forward.2} parent=31 // pred_region
          %186 = dma.done %s178, 256
        $region40: #{forward.2} parent=31 // pred_fallthru
          _
        %p187 = pneg %p34
        %p188 = pneg %p31
        %p189 = pneg %p55
        %p190 = pneg %p52
        %s191 = sand.u32 %s68, 1
        %s192 = scalar_lea.sflag [#allocation6], %s191
        %s193 = sand.u32 %s68, 1
        %s194 = smul.addr %s193, 16
        %s195 = scalar_lea.vmem [#allocation5], %s194
        %p196 = pneg %p81
        %p197 = pneg %p78
        %p198 = pneg %p107
        %p199 = pneg %p104
        %p200 = scmp.lt.s32.totalorder %s18, 1
        %s201 = scalar_select %p200, %s18, 1
        %s202 = smul.addr %s201, 4
        %s203 = scalar_lea.vmem %s3, %s202
        %p204 = scmp.lt.s32.totalorder %s18, 1
        %s205 = scalar_select %p204, %s18, 1
        %s206 = smul.addr %s205, 4
        %s207 = scalar_lea.vmem %s3, %s206
        %v209 = vld [vmem:[%s181] sm:$0xff]
        %v210 = vld [vmem:[%s181 + $0x8] sm:$0xff]
        %v211 = vpack.c.bf16 %v209, %v209
        %v212 = vpack.c.bf16 %v210, %v210
        %v215 = vunpack.c.l.b16 %v211
        %v216 = vunpack.c.l.b16 %v212
        %v217 = vpack.c.b16 %v216, %v215
        %v218 = vrot.slane %v217, 7
        %vm219 = vcmask 1040384
        %v222 = vsel %vm219, 0, %v218
        %v223 = vsel %vm219, %v218, 0
        %vm224 = vsmask.f32 7424
        %v225 = vshrl.u32 %v222, 16
        %v227 = vshll.u32 %v222, 16
        %v229 = vrot.slane %v227, 1
        %v230 = vor.u32 %v225, %v229
        %v231 = vshll.u32 %v223, 16
        %v233 = vrot.slane %v231, 1
        %v234 = vsel %vm224, %v230, %v233
        %235 = vrot.lane.b32.xlu0 %v234, 16
        %v236 = vpop.permute.xlu0 %235
        %vm239 = vcmask 1046528
        %v240 = vrot.slane %v222, 1
        %v241 = vrot.slane %v223, 1
        %v242 = vsel %vm239, %v240, %v241
        %243 = vrot.lane.b32.xlu0 %v242, 32
        %v244 = vpop.permute.xlu0 %243
        %vm245 = vsmask.f32 6400
        %v246 = vrot.slane %v225, 1
        %v247 = vrot.slane %v227, 2
        %v248 = vor.u32 %v246, %v247
        %v249 = vshrl.u32 %v223, 16
        %v251 = vrot.slane %v249, 1
        %v252 = vrot.slane %v231, 2
        %v253 = vor.u32 %v251, %v252
        %v254 = vsel %vm245, %v248, %v253
        %255 = vrot.lane.b32.xlu0 %v254, 48
        %v256 = vpop.permute.xlu0 %255
        %vm257 = vcmask 1045504
        %v258 = vrot.slane %v222, 2
        %v259 = vrot.slane %v223, 2
        %v260 = vsel %vm257, %v258, %v259
        %261 = vrot.lane.b32.xlu0 %v260, 64
        %v262 = vpop.permute.xlu0 %261
        %vm263 = vcmask 130048
        %v265 = vsel %vm263, %v222, %v236
        %vm266 = vcmask 261120
        %v268 = vsel %vm266, %v265, %v244
        %vm269 = vcmask 392192
        %v271 = vsel %vm269, %v268, %v256
        %vm272 = vcmask 523264
        %v274 = vsel %vm272, %v271, %v262
        %v275 = vld [vmem:[#allocation3] sm:$0xff]
        %v276 = vld [vmem:[#allocation3 + $0x8] sm:$0xff]
        %v277 = vld [vmem:[#allocation3 + $0x10] sm:$0xff]
        %v278 = vld [vmem:[#allocation3 + $0x18] sm:$0xff]
        %v279 = vld [vmem:[#allocation3 + $0x20] sm:$0xff]
        %v280 = vld [vmem:[#allocation3 + $0x28] sm:$0xff]
        %v281 = vld [vmem:[#allocation3 + $0x30] sm:$0xff]
        %v282 = vld [vmem:[#allocation3 + $0x38] sm:$0xff]
        %v283 = vld [vmem:[#allocation3 + $0x40] sm:$0xff]
        %v284 = vld [vmem:[#allocation3 + $0x48] sm:$0xff]
        %v295 = vunpack.c.l.b16 %v275
        %v296 = vunpack.c.h.b16 %v275
        %v297 = vunpack.c.l.b16 %v276
        %v298 = vunpack.c.h.b16 %v276
        %v299 = vunpack.c.l.b16 %v277
        %v300 = vunpack.c.h.b16 %v277
        %v301 = vunpack.c.l.b16 %v278
        %v302 = vunpack.c.h.b16 %v278
        %v303 = vunpack.c.l.b16 %v279
        %v304 = vunpack.c.h.b16 %v279
        %v305 = vunpack.c.l.b16 %v280
        %v306 = vunpack.c.h.b16 %v280
        %v307 = vunpack.c.l.b16 %v281
        %v308 = vunpack.c.h.b16 %v281
        %v309 = vunpack.c.l.b16 %v282
        %v310 = vunpack.c.h.b16 %v282
        %v311 = vunpack.c.l.b16 %v283
        %v312 = vunpack.c.h.b16 %v283
        %v313 = vunpack.c.l.b16 %v284
        %v314 = vunpack.c.h.b16 %v284
        %v315 = vpack.c.b16 %v297, %v295
        %v316 = vpack.c.b16 %v298, %v296
        %v317 = vpack.c.b16 %v301, %v299
        %v318 = vpack.c.b16 %v302, %v300
        %v319 = vpack.c.b16 %v305, %v303
        %v320 = vpack.c.b16 %v306, %v304
        %v321 = vpack.c.b16 %v309, %v307
        %v322 = vpack.c.b16 %v310, %v308
        %v323 = vpack.c.b16 %v313, %v311
        %v324 = vpack.c.b16 %v314, %v312
        %vm335 = vcmask 654336
        %v336 = vsel %vm335, %v274, 0
        %338 = vmatpush.bf16.msra.mxu0 0
        %339 = vmatpush.bf16.msra.mxu0 0
        %340 = vmatpush.bf16.msra.mxu0 0
        %341 = vmatpush.bf16.msra.mxu0 %v323
        %342 = vmatpush.bf16.msra.mxu0 %v321
        %343 = vmatpush.bf16.msra.mxu0 %v319
        %344 = vmatpush.bf16.msra.mxu0 %v317
        %345 = vmatpush.bf16.msra.mxu0 %v315
        %346 = vmatmul.bf16.gmra.mxu0 %v336
        %v347 = vpop.f32.mrf.mxu0
        %v348 = vadd.f32 0.0, %v347
        %v349 = vpop.f32.mrf.mxu0
        %v350 = vadd.f32 0.0, %v349
        %351 = vdwg.mxu0
        %352 = vmatpush.bf16.msra.mxu0 0
        %353 = vmatpush.bf16.msra.mxu0 0
        %354 = vmatpush.bf16.msra.mxu0 0
        %355 = vmatpush.bf16.msra.mxu0 %v324
        %356 = vmatpush.bf16.msra.mxu0 %v322
        %357 = vmatpush.bf16.msra.mxu0 %v320
        %358 = vmatpush.bf16.msra.mxu0 %v318
        %359 = vmatpush.bf16.msra.mxu0 %v316
        %360 = vmatmul.bf16.gmra.mxu0 %v336
        %v361 = vpop.f32.mrf.mxu0
        %v362 = vadd.f32 0.0, %v361
        %v363 = vpop.f32.mrf.mxu0
        %v364 = vadd.f32 0.0, %v363
        %365 = vdwg.mxu0
        %v366 = vmax.f32 %v348, %v362
        %v367 = vmax.f32 %v350, %v364
        %368 = vst [vmem:[#allocation2] sm:$0xff] %v366
        %369 = vst [vmem:[#allocation2 + $0x8] sm:$0xff] %v367
        %v370 = vld [vmem:[#allocation2] ss:$2 sm:$0xff]
        %s371 = scalar_lea.vmem [#allocation2], 1
        %v372 = vld [vmem:[%s371] ss:$2 sm:$0xff]
        %v373 = vmax.f32 %v370, %v372
        %v374 = vld [vmem:[%s1] sm:$0x1]
        %v376 = vperm.slane %v374, 0
        %v378 = vadd.f32 %v373, %v376
        %v379 = vmax.f32 %v378, 0.0
        %v380 = vpack.c.bf16 %v379, %v379
        %381 = vst [vmem:[%s207] sm:$0xf] %v380
        %p382 = scmp.lt.s32.totalorder %s18, 1
        %s383 = scalar_select %p382, %s18, 1
        %s384 = smul.addr %s383, 4
        %s385 = scalar_lea.vmem %s3, %s384
        // Predicated region
        $region41: #{forward.2} parent=31 // pred_check
          %p386 = pneg %p104
        $region42: #{forward.2} parent=31 // pred_check_branch
          %388 = sbr.rel (%p386) target = $region44
        $region43: #{forward.2} parent=31 // pred_region
          _
        $region44: #{forward.2} parent=31 // pred_fallthru
          _
      $region32: #{forward.2} parent=5 // pred_fallthru
        _
      %p389 = scmp.le.s32.totalorder 2, %s13
      // Predicated region
      $region45: #{forward.2} parent=5 // pred_check
        %p390 = pneg %p389
      $region46: #{forward.2} parent=5 // pred_check_branch
        %392 = sbr.rel (%p390) target = $region48
      $region47: #{forward.2} parent=5 // pred_region
        %s393 = ssub.s32 %s13, 2
        // Predicated region
        $region49: #{forward.2} parent=47 // pred_check
          %p394 = pneg %p110
        $region50: #{forward.2} parent=47 // pred_check_branch
          %396 = sbr.rel (%p394) target = $region52
        $region51: #{forward.2} parent=47 // pred_region
          %p397 = scmp.lt.s32.totalorder %s19, 1
          %s398 = scalar_select %p397, %s19, 1
          %s399 = smul.addr %s398, 4
          %s400 = scalar_lea.vmem %s3, %s399
        $region52: #{forward.2} parent=47 // pred_fallthru
          _
      $region48: #{forward.2} parent=5 // pred_fallthru
        _
    $region6: #{forward.2} parent=1 // loop_footer
      %s17 = sadd.s32 1, %s13
    $region7: #{forward.2} parent=1 // loop_footer_branch
      %12 = sbr.rel target = $region3
    $region8: #{forward.2} parent=1 // loop_exit
      _
    %401 = vsyncpa [#allocation4], 1
    %s402 = scalar_lea.sflag [#allocation4], 1
    %403 = vsyncpa %s402, 1
    %404 = vsyncpa [#allocation6], 1
    %s405 = scalar_lea.sflag [#allocation6], 1
    %406 = vsyncpa %s405, 1

// kernel: forward.3
$region0: #{forward.3}
  #allocation0 [shape = 'u32[]', space=smem, size = 0x4, offset = 0x4, fixed_abs, tag = 'smem constant byte address 0x4 - core index']
  #allocation1 [shape = 'u32[72,128]{1,0:T(1,128)}', space=vmem, size = 0x9000, scoped, tag = 'internal scratch']
  #allocation2 [shape = 'f32[2,128]{1,0:T(2,128)}', space=vmem, size = 0x400, scoped, tag = 'scratch operand']
  %s0 = inlined_call_operand.vmem [shape: bf16[2,1024], index: 0, kind: input, shape index: {}]
  %s1 = inlined_call_operand.hbm [shape: bf16[1024,256], index: 1, kind: input, shape index: {}]
  %s2 = inlined_call_operand.vmem [shape: f32[1,256], index: 2, kind: input, shape index: {}]
  %s3 = inlined_call_operand.vmem [shape: f32[256,3], index: 3, kind: input, shape index: {}]
  %s4 = inlined_call_operand.vmem [shape: f32[2,2,3], index: 4, kind: output, shape index: {}]
  %s5 = sld [smem:[#allocation0]]
  $region61: #{forward.3} parent=0
    _
  %s7 = ssub.s32 1, %s5
  %s8 = scalar_select 0, %s7, %s5
  $region1: #{forward.3} parent=0
    #allocation3 [shape = 'u8[262144]{0}', space=vmem, size = 0x40000, scoped, tag = 'input window, operand 1']
    #allocation4 [shape = 's32[2]{0}', space=sflag, size = 0x8, scoped, tag = 'scoped memory for forward.3']
    %9 = vsyncpa [#allocation4], 0
    %s10 = scalar_lea.sflag [#allocation4], 1
    %11 = vsyncpa %s10, 0
    loop: start=0, step=1, limit=6
    $region2: #{forward.3} parent=1 // loop_pre_header
      _
    $region3: #{forward.3} parent=1 // loop_header
      %s13 = sphi 0, %s17
      %p14 = scmp.ge.s32.totalorder %s13, 6
      %s20 = sphi 0, %s32
      %s21 = sphi 0, %s28
      %s22 = sphi 0, %s20
      %s23 = sphi 0, %s21
      %s24 = sphi 0, %s22
      %s25 = sphi 0, %s23
      %s35 = sphi 0, %s37
      %s38 = sphi 0, %s35
      %s39 = sphi 0, %s38
      %s55 = sphi 0, %s39
      %s63 = sphi 0, %s65
      %s66 = sphi 0, %s63
      %s67 = sphi 0, %s66
      %s83 = sphi 0, %s67
      %s89 = sphi 0, %s91
      %s92 = sphi 0, %s89
      %s93 = sphi 0, %s92
      %s109 = sphi 0, %s93
      %s115 = sphi 0, %s117
      %s118 = sphi 0, %s115
      %s119 = sphi 0, %s118
      %s135 = sphi 0, %s119
      %s141 = sphi 0, %s143
      %s144 = sphi 0, %s141
      %s145 = sphi 0, %s144
      %s161 = sphi 0, %s145
    $region4: #{forward.3} parent=1 // loop_header_branch
      %16 = sbr.rel (%p14) target = $region8
    $region5: #{forward.3} parent=1 // loop_body
      %s18 = ssub.s32 %s13, 1
      %s19 = ssub.s32 %s13, 2
      %s26 = sadd.s32 1, %s21
      %p27 = scmp.ge.s32.totalorder %s26, 2
      %s28 = scalar_select %p27, 0, %s26
      %s29 = sadd.s32 1, %s20
      %s30 = scalar_select %p27, %s29, %s20
      %p31 = scmp.ge.s32.totalorder %s30, 2
      %s32 = scalar_select %p31, 0, %s30
      %s33 = ssub.s32 %s21, %s28
      %p34 = scmp.eq.s32.totalorder %s33, 0
      %s36 = sadd.s32 %s35, 1
      %s37 = scalar_select %p34, %s35, %s36
      %p40 = pneg %p34
      %p41 = scmp.eq.s32.totalorder %s13, 3
      %p42 = por %p40, %p41
      %p43 = scmp.ne.s32.totalorder %s35, %s38
      %p44 = scmp.eq.s32.totalorder %s13, 0
      %p45 = por %p43, %p44
      %p46 = scmp.ne.s32.totalorder %s35, %s38
      %p47 = scmp.eq.s32.totalorder %s18, 3
      %p48 = por %p46, %p47
      %p49 = scmp.ne.s32.totalorder %s38, %s39
      %p50 = scmp.eq.s32.totalorder %s18, 0
      %p51 = por %p49, %p50
      %p52 = scmp.ne.s32.totalorder %s38, %s39
      %p53 = scmp.eq.s32.totalorder %s19, 3
      %p54 = por %p52, %p53
      %p56 = scmp.ne.s32.totalorder %s39, %s55
      %p57 = scmp.eq.s32.totalorder %s19, 0
      %p58 = por %p56, %p57
      %s59 = ssub.s32 %s21, %s28
      %s60 = ssub.s32 %s20, %s32
      %s61 = sor.u32 %s59, %s60
      %p62 = scmp.eq.s32.totalorder %s61, 0
      %s64 = sadd.s32 %s63, 1
      %s65 = scalar_select %p62, %s63, %s64
      %p68 = pneg %p62
      %p69 = scmp.eq.s32.totalorder %s13, 3
      %p70 = por %p68, %p69
      %p71 = scmp.ne.s32.totalorder %s63, %s66
      %p72 = scmp.eq.s32.totalorder %s13, 0
      %p73 = por %p71, %p72
      %p74 = scmp.ne.s32.totalorder %s63, %s66
      %p75 = scmp.eq.s32.totalorder %s18, 3
      %p76 = por %p74, %p75
      %p77 = scmp.ne.s32.totalorder %s66, %s67
      %p78 = scmp.eq.s32.totalorder %s18, 0
      %p79 = por %p77, %p78
      %p80 = scmp.ne.s32.totalorder %s66, %s67
      %p81 = scmp.eq.s32.totalorder %s19, 3
      %p82 = por %p80, %p81
      %p84 = scmp.ne.s32.totalorder %s67, %s83
      %p85 = scmp.eq.s32.totalorder %s19, 0
      %p86 = por %p84, %p85
      %s87 = ssub.s32 %s20, %s32
      %p88 = scmp.eq.s32.totalorder %s87, 0
      %s90 = sadd.s32 %s89, 1
      %s91 = scalar_select %p88, %s89, %s90
      %p94 = pneg %p88
      %p95 = scmp.eq.s32.totalorder %s13, 3
      %p96 = por %p94, %p95
      %p97 = scmp.ne.s32.totalorder %s89, %s92
      %p98 = scmp.eq.s32.totalorder %s13, 0
      %p99 = por %p97, %p98
      %p100 = scmp.ne.s32.totalorder %s89, %s92
      %p101 = scmp.eq.s32.totalorder %s18, 3
      %p102 = por %p100, %p101
      %p103 = scmp.ne.s32.totalorder %s92, %s93
      %p104 = scmp.eq.s32.totalorder %s18, 0
      %p105 = por %p103, %p104
      %p106 = scmp.ne.s32.totalorder %s92, %s93
      %p107 = scmp.eq.s32.totalorder %s19, 3
      %p108 = por %p106, %p107
      %p110 = scmp.ne.s32.totalorder %s93, %s109
      %p111 = scmp.eq.s32.totalorder %s19, 0
      %p112 = por %p110, %p111
      %s113 = ssub.s32 %s20, %s32
      %p114 = scmp.eq.s32.totalorder %s113, 0
      %s116 = sadd.s32 %s115, 1
      %s117 = scalar_select %p114, %s115, %s116
      %p120 = pneg %p114
      %p121 = scmp.eq.s32.totalorder %s13, 3
      %p122 = por %p120, %p121
      %p123 = scmp.ne.s32.totalorder %s115, %s118
      %p124 = scmp.eq.s32.totalorder %s13, 0
      %p125 = por %p123, %p124
      %p126 = scmp.ne.s32.totalorder %s115, %s118
      %p127 = scmp.eq.s32.totalorder %s18, 3
      %p128 = por %p126, %p127
      %p129 = scmp.ne.s32.totalorder %s118, %s119
      %p130 = scmp.eq.s32.totalorder %s18, 0
      %p131 = por %p129, %p130
      %p132 = scmp.ne.s32.totalorder %s118, %s119
      %p133 = scmp.eq.s32.totalorder %s19, 3
      %p134 = por %p132, %p133
      %p136 = scmp.ne.s32.totalorder %s119, %s135
      %p137 = scmp.eq.s32.totalorder %s19, 0
      %p138 = por %p136, %p137
      %s139 = ssub.s32 %s20, %s32
      %p140 = scmp.eq.s32.totalorder %s139, 0
      %s142 = sadd.s32 %s141, 1
      %s143 = scalar_select %p140, %s141, %s142
      %p146 = pneg %p140
      %p147 = scmp.eq.s32.totalorder %s13, 3
      %p148 = por %p146, %p147
      %p149 = scmp.ne.s32.totalorder %s141, %s144
      %p150 = scmp.eq.s32.totalorder %s13, 0
      %p151 = por %p149, %p150
      %p152 = scmp.ne.s32.totalorder %s141, %s144
      %p153 = scmp.eq.s32.totalorder %s18, 3
      %p154 = por %p152, %p153
      %p155 = scmp.ne.s32.totalorder %s144, %s145
      %p156 = scmp.eq.s32.totalorder %s18, 0
      %p157 = por %p155, %p156
      %p158 = scmp.ne.s32.totalorder %s144, %s145
      %p159 = scmp.eq.s32.totalorder %s19, 3
      %p160 = por %p158, %p159
      %p162 = scmp.ne.s32.totalorder %s145, %s161
      %p163 = scmp.eq.s32.totalorder %s19, 0
      %p164 = por %p162, %p163
      %p165 = scmp.le.s32.totalorder 1, %s13
      %p166 = scmp.lt.s32.totalorder %s13, 5
      %p167 = pnand %p165, %p166
      %p168 = pneg %p167
      // Predicated region
      $region9: #{forward.3} parent=5 // pred_check
        _
      $region10: #{forward.3} parent=5 // pred_check_branch
        %170 = sbr.rel (%p167) target = $region12
      $region11: #{forward.3} parent=5 // pred_region
        %s171 = ssub.s32 %s13, 1
      $region12: #{forward.3} parent=5 // pred_fallthru
        _
      %p172 = scmp.lt.s32.totalorder %s13, 4
      // Predicated region
      $region13: #{forward.3} parent=5 // pred_check
        %p173 = pneg %p172
      $region14: #{forward.3} parent=5 // pred_check_branch
        %175 = sbr.rel (%p173) target = $region16
      $region15: #{forward.3} parent=5 // pred_region
        // Predicated region
        $region17: #{forward.3} parent=15 // pred_check
          %p176 = pneg %p45
        $region18: #{forward.3} parent=15 // pred_check_branch
          %178 = sbr.rel (%p176) target = $region20
        $region19: #{forward.3} parent=15 // pred_region
          %s179 = smul.u32 4, %s21
          %p180 = scmp.lt.s32.totalorder %s179, 7
          %s181 = scalar_select %p180, %s179, 7
          %s182 = scalar_lea.vmem %s0, %s181
          %s183 = smul.u32 4, %s21
        $region20: #{forward.3} parent=15 // pred_fallthru
          _
        // Predicated region
        $region21: #{forward.3} parent=15 // pred_check
          %p184 = pneg %p73
        $region22: #{forward.3} parent=15 // pred_check_branch
          %186 = sbr.rel (%p184) target = $region24
        $region23: #{forward.3} parent=15 // pred_region
          %s187 = sand.u32 %s63, 1
          %s188 = scalar_lea.sflag [#allocation4], %s187
          %s189 = sand.u32 %s63, 1
          %s190 = smul.addr %s189, 256
          %s191 = scalar_lea.vmem [#allocation3], %s190
          %s192 = smul.u32 64, %s21
          %194 = vsyncadd %s188, 0
          %s195 = smul.addr %s192, 2
          %s196 = sadd.s32 %s20, %s195
          %s197 = smul.addr %s196, 4
          %s198 = scalar_lea.hbm %s1, %s197
          %s199 = sshll.u32 %s198, 4
          %s200 = int_to_ptr.hbm [resolvable:$true] %s199
          %s201 = sshll.u32 %s191, 4
          %s202 = int_to_ptr.vmem [resolvable:$true] %s201
          %207 = dma.hbm_to_vmem [thread:$0]  %s200, 4096, %s202, %s188, 128, 64, 4
        $region24: #{forward.3} parent=15 // pred_fallthru
          _
        // Predicated region
        $region25: #{forward.3} parent=15 // pred_check
          %p208 = pneg %p99
        $region26: #{forward.3} parent=15 // pred_check_branch
          %210 = sbr.rel (%p208) target = $region28
        $region27: #{forward.3} parent=15 // pred_region
          %p211 = scmp.lt.s32.totalorder %s20, 1
          %s212 = scalar_select %p211, %s20, 1
          %s213 = scalar_lea.vmem %s2, %s212
        $region28: #{forward.3} parent=15 // pred_fallthru
          _
        // Predicated region
        $region29: #{forward.3} parent=15 // pred_check
          %p214 = pneg %p125
        $region30: #{forward.3} parent=15 // pred_check_branch
          %216 = sbr.rel (%p214) target = $region32
        $region31: #{forward.3} parent=15 // pred_region
          %s217 = smul.u32 16, %s20
          %p218 = scmp.lt.s32.totalorder %s217, 31
          %s219 = scalar_select %p218, %s217, 31
          %s220 = smul.addr %s219, 8
          %s221 = scalar_lea.vmem %s3, %s220
          %s222 = smul.u32 16, %s20
        $region32: #{forward.3} parent=15 // pred_fallthru
          _
      $region16: #{forward.3} parent=5 // pred_fallthru
        _
      %p223 = scmp.le.s32.totalorder 1, %s13
      %p224 = scmp.lt.s32.totalorder %s13, 5
      %p225 = pnand %p223, %p224
      %p226 = pneg %p225
      // Predicated region
      $region33: #{forward.3} parent=5 // pred_check
        _
      $region34: #{forward.3} parent=5 // pred_check_branch
        %228 = sbr.rel (%p225) target = $region36
      $region35: #{forward.3} parent=5 // pred_region
        %s229 = ssub.s32 %s13, 1
        %s230 = sand.u32 %s66, 1
        %s231 = scalar_lea.sflag [#allocation4], %s230
        %s232 = sand.u32 %s66, 1
        %s233 = smul.addr %s232, 256
        %s234 = scalar_lea.vmem [#allocation3], %s233
        // Predicated region
        $region37: #{forward.3} parent=35 // pred_check
          %p235 = pneg %p79
        $region38: #{forward.3} parent=35 // pred_check_branch
          %237 = sbr.rel (%p235) target = $region40
        $region39: #{forward.3} parent=35 // pred_region
          %239 = dma.done %s231, 4096
        $region40: #{forward.3} parent=35 // pred_fallthru
          _
        %s240 = smul.u32 4, %s23
        %p241 = scmp.lt.s32.totalorder %s240, 7
        %s242 = scalar_select %p241, %s240, 7
        %s243 = scalar_lea.vmem %s0, %s242
        %p244 = pneg %p51
        %p245 = pneg %p48
        %s246 = sand.u32 %s66, 1
        %s247 = scalar_lea.sflag [#allocation4], %s246
        %s248 = sand.u32 %s66, 1
        %s249 = smul.addr %s248, 256
        %s250 = scalar_lea.vmem [#allocation3], %s249
        %p251 = pneg %p79
        %p252 = pneg %p76
        %p253 = scmp.lt.s32.totalorder %s22, 1
        %s254 = scalar_select %p253, %s22, 1
        %s255 = scalar_lea.vmem %s2, %s254
        %p256 = pneg %p105
        %p257 = pneg %p102
        %s258 = smul.u32 16, %s22
        %p259 = scmp.lt.s32.totalorder %s258, 31
        %s260 = scalar_select %p259, %s258, 31
        %s261 = smul.addr %s260, 8
        %s262 = scalar_lea.vmem %s3, %s261
        %p263 = pneg %p131
        %p264 = pneg %p128
        %p265 = pneg %p157
        %p266 = pneg %p154
        %p267 = scmp.lt.s32.totalorder %s22, 1
        %s268 = scalar_select %p267, %s22, 1
        %s269 = smul.addr %s268, 2
        %s270 = scalar_lea.vmem %s4, %s269
        %s271 = smul.u32 4, %s23
        %p272 = scmp.lt.s32.totalorder %s271, 7
        %s273 = scalar_select %p272, %s271, 7
        %s274 = scalar_lea.vmem %s0, %s273
        %s275 = smul.u32 4, %s23
        %s276 = smul.u32 64, %s23
        %p277 = scmp.lt.s32.totalorder %s22, 1
        %s278 = scalar_select %p277, %s22, 1
        %s279 = scalar_lea.vmem %s2, %s278
        %s280 = smul.u32 16, %s22
        %p281 = scmp.lt.s32.totalorder %s280, 31
        %s282 = scalar_select %p281, %s280, 31
        %s283 = smul.addr %s282, 8
        %s284 = scalar_lea.vmem %s3, %s283
        %s285 = smul.u32 16, %s22
        %p286 = scmp.lt.s32.totalorder %s22, 1
        %s287 = scalar_select %p286, %s22, 1
        %s288 = smul.addr %s287, 2
        %s289 = scalar_lea.vmem %s4, %s288
        %p290 = scmp.eq.s32.totalorder %s23, 0
        // Predicated region
        $region41: #{forward.3} parent=35 // pred_check
          %p291 = pneg %p290
        $region42: #{forward.3} parent=35 // pred_check_branch
          %293 = sbr.rel (%p291) target = $region44
        $region43: #{forward.3} parent=35 // pred_region
          %294 = vst [vmem:[#allocation2] sm:$0x3] 0.0
        $region44: #{forward.3} parent=35 // pred_fallthru
          _
        %v295 = vld [vmem:[#allocation2] sm:$0x3]
        %v296 = vld [vmem:[%s274] sm:$0xf]
        %v297 = vld [vmem:[%s234] sm:$0xf]
        %v298 = vld [vmem:[%s234 + $0x4] sm:$0xf]
        %v299 = vld [vmem:[%s234 + $0x8] sm:$0xf]
        %v300 = vld [vmem:[%s234 + $0xc] sm:$0xf]
        %v301 = vld [vmem:[%s234 + $0x10] sm:$0xf]
        %v302 = vld [vmem:[%s234 + $0x14] sm:$0xf]
        %v303 = vld [vmem:[%s234 + $0x18] sm:$0xf]
        %v304 = vld [vmem:[%s234 + $0x1c] sm:$0xf]
        %v305 = vld [vmem:[%s234 + $0x20] sm:$0xf]
        %v306 = vld [vmem:[%s234 + $0x24] sm:$0xf]
        %v307 = vld [vmem:[%s234 + $0x28] sm:$0xf]
        %v308 = vld [vmem:[%s234 + $0x2c] sm:$0xf]
        %v309 = vld [vmem:[%s234 + $0x30] sm:$0xf]
        %v310 = vld [vmem:[%s234 + $0x34] sm:$0xf]
        %v311 = vld [vmem:[%s234 + $0x38] sm:$0xf]
        %v312 = vld [vmem:[%s234 + $0x3c] sm:$0xf]
        %v313 = vld [vmem:[%s234 + $0x40] sm:$0xf]
        %v314 = vld [vmem:[%s234 + $0x44] sm:$0xf]
        %v315 = vld [vmem:[%s234 + $0x48] sm:$0xf]
        %v316 = vld [vmem:[%s234 + $0x4c] sm:$0xf]
        %v317 = vld [vmem:[%s234 + $0x50] sm:$0xf]
        %v318 = vld [vmem:[%s234 + $0x54] sm:$0xf]
        %v319 = vld [vmem:[%s234 + $0x58] sm:$0xf]
        %v320 = vld [vmem:[%s234 + $0x5c] sm:$0xf]
        %v321 = vld [vmem:[%s234 + $0x60] sm:$0xf]
        %v322 = vld [vmem:[%s234 + $0x64] sm:$0xf]
        %v323 = vld [vmem:[%s234 + $0x68] sm:$0xf]
        %v324 = vld [vmem:[%s234 + $0x6c] sm:$0xf]
        %v325 = vld [vmem:[%s234 + $0x70] sm:$0xf]
        %v326 = vld [vmem:[%s234 + $0x74] sm:$0xf]
        %v327 = vld [vmem:[%s234 + $0x78] sm:$0xf]
        %v328 = vld [vmem:[%s234 + $0x7c] sm:$0xf]
        %v329 = vld [vmem:[%s234 + $0x80] sm:$0xf]
        %v330 = vld [vmem:[%s234 + $0x84] sm:$0xf]
        %v331 = vld [vmem:[%s234 + $0x88] sm:$0xf]
        %v332 = vld [vmem:[%s234 + $0x8c] sm:$0xf]
        %v333 = vld [vmem:[%s234 + $0x90] sm:$0xf]
        %v334 = vld [vmem:[%s234 + $0x94] sm:$0xf]
        %v335 = vld [vmem:[%s234 + $0x98] sm:$0xf]
        %v336 = vld [vmem:[%s234 + $0x9c] sm:$0xf]
        %v337 = vld [vmem:[%s234 + $0xa0] sm:$0xf]
        %v338 = vld [vmem:[%s234 + $0xa4] sm:$0xf]
        %v339 = vld [vmem:[%s234 + $0xa8] sm:$0xf]
        %v340 = vld [vmem:[%s234 + $0xac] sm:$0xf]
        %v341 = vld [vmem:[%s234 + $0xb0] sm:$0xf]
        %v342 = vld [vmem:[%s234 + $0xb4] sm:$0xf]
        %v343 = vld [vmem:[%s234 + $0xb8] sm:$0xf]
        %v344 = vld [vmem:[%s234 + $0xbc] sm:$0xf]
        %v345 = vld [vmem:[%s234 + $0xc0] sm:$0xf]
        %v346 = vld [vmem:[%s234 + $0xc4] sm:$0xf]
        %v347 = vld [vmem:[%s234 + $0xc8] sm:$0xf]
        %v348 = vld [vmem:[%s234 + $0xcc] sm:$0xf]
        %v349 = vld [vmem:[%s234 + $0xd0] sm:$0xf]
        %v350 = vld [vmem:[%s234 + $0xd4] sm:$0xf]
        %v351 = vld [vmem:[%s234 + $0xd8] sm:$0xf]
        %v352 = vld [vmem:[%s234 + $0xdc] sm:$0xf]
        %v353 = vld [vmem:[%s234 + $0xe0] sm:$0xf]
        %v354 = vld [vmem:[%s234 + $0xe4] sm:$0xf]
        %v355 = vld [vmem:[%s234 + $0xe8] sm:$0xf]
        %v356 = vld [vmem:[%s234 + $0xec] sm:$0xf]
        %v357 = vld [vmem:[%s234 + $0xf0] sm:$0xf]
        %v358 = vld [vmem:[%s234 + $0xf4] sm:$0xf]
        %v359 = vld [vmem:[%s234 + $0xf8] sm:$0xf]
        %v360 = vld [vmem:[%s234 + $0xfc] sm:$0xf]
        %362 = vst [vmem:[#allocation1] ss:$9 sm:$0xff] %v296
        %v363 = vld [vmem:[#allocation1] sm:$0xff]
        %v364 = vld [vmem:[#allocation1 + $0x9] sm:$0xff]
        %v365 = vld [vmem:[#allocation1 + $0x12] sm:$0xff]
        %v366 = vld [vmem:[#allocation1 + $0x1b] sm:$0xff]
        %v435 = vunpack.c.l.b16 %v297
        %v436 = vunpack.c.l.b16 %v298
        %v437 = vunpack.c.l.b16 %v299
        %v438 = vunpack.c.l.b16 %v300
        %v439 = vunpack.c.l.b16 %v301
        %v440 = vunpack.c.l.b16 %v302
        %v441 = vunpack.c.l.b16 %v303
        %v442 = vunpack.c.l.b16 %v304
        %v443 = vunpack.c.l.b16 %v305
        %v444 = vunpack.c.l.b16 %v306
        %v445 = vunpack.c.l.b16 %v307
        %v446 = vunpack.c.l.b16 %v308
        %v447 = vunpack.c.l.b16 %v309
        %v448 = vunpack.c.l.b16 %v310
        %v449 = vunpack.c.l.b16 %v311
        %v450 = vunpack.c.l.b16 %v312
        %v451 = vunpack.c.l.b16 %v313
        %v452 = vunpack.c.l.b16 %v314
        %v453 = vunpack.c.l.b16 %v315
        %v454 = vunpack.c.l.b16 %v316
        %v455 = vunpack.c.l.b16 %v317
        %v456 = vunpack.c.l.b16 %v318
        %v457 = vunpack.c.l.b16 %v319
        %v458 = vunpack.c.l.b16 %v320
        %v459 = vunpack.c.l.b16 %v321
        %v460 = vunpack.c.l.b16 %v322
        %v461 = vunpack.c.l.b16 %v323
        %v462 = vunpack.c.l.b16 %v324
        %v463 = vunpack.c.l.b16 %v325
        %v464 = vunpack.c.l.b16 %v326
        %v465 = vunpack.c.l.b16 %v327
        %v466 = vunpack.c.l.b16 %v328
        %v467 = vunpack.c.l.b16 %v329
        %v468 = vunpack.c.l.b16 %v330
        %v469 = vunpack.c.l.b16 %v331
        %v470 = vunpack.c.l.b16 %v332
        %v471 = vunpack.c.l.b16 %v333
        %v472 = vunpack.c.l.b16 %v334
        %v473 = vunpack.c.l.b16 %v335
        %v474 = vunpack.c.l.b16 %v336
        %v475 = vunpack.c.l.b16 %v337
        %v476 = vunpack.c.l.b16 %v338
        %v477 = vunpack.c.l.b16 %v339
        %v478 = vunpack.c.l.b16 %v340
        %v479 = vunpack.c.l.b16 %v341
        %v480 = vunpack.c.l.b16 %v342
        %v481 = vunpack.c.l.b16 %v343
        %v482 = vunpack.c.l.b16 %v344
        %v483 = vunpack.c.l.b16 %v345
        %v484 = vunpack.c.l.b16 %v346
        %v485 = vunpack.c.l.b16 %v347
        %v486 = vunpack.c.l.b16 %v348
        %v487 = vunpack.c.l.b16 %v349
        %v488 = vunpack.c.l.b16 %v350
        %v489 = vunpack.c.l.b16 %v351
        %v490 = vunpack.c.l.b16 %v352
        %v491 = vunpack.c.l.b16 %v353
        %v492 = vunpack.c.l.b16 %v354
        %v493 = vunpack.c.l.b16 %v355
        %v494 = vunpack.c.l.b16 %v356
        %v495 = vunpack.c.l.b16 %v357
        %v496 = vunpack.c.l.b16 %v358
        %v497 = vunpack.c.l.b16 %v359
        %v498 = vunpack.c.l.b16 %v360
        %v499 = vpack.c.b16 %v436, %v435
        %v500 = vpack.c.b16 %v438, %v437
        %v501 = vpack.c.b16 %v440, %v439
        %v502 = vpack.c.b16 %v442, %v441
        %v503 = vpack.c.b16 %v444, %v443
        %v504 = vpack.c.b16 %v446, %v445
        %v505 = vpack.c.b16 %v448, %v447
        %v506 = vpack.c.b16 %v450, %v449
        %v507 = vpack.c.b16 %v452, %v451
        %v508 = vpack.c.b16 %v454, %v453
        %v509 = vpack.c.b16 %v456, %v455
        %v510 = vpack.c.b16 %v458, %v457
        %v511 = vpack.c.b16 %v460, %v459
        %v512 = vpack.c.b16 %v462, %v461
        %v513 = vpack.c.b16 %v464, %v463
        %v514 = vpack.c.b16 %v466, %v465
        %v515 = vpack.c.b16 %v468, %v467
        %v516 = vpack.c.b16 %v470, %v469
        %v517 = vpack.c.b16 %v472, %v471
        %v518 = vpack.c.b16 %v474, %v473
        %v519 = vpack.c.b16 %v476, %v475
        %v520 = vpack.c.b16 %v478, %v477
        %v521 = vpack.c.b16 %v480, %v479
        %v522 = vpack.c.b16 %v482, %v481
        %v523 = vpack.c.b16 %v484, %v483
        %v524 = vpack.c.b16 %v486, %v485
        %v525 = vpack.c.b16 %v488, %v487
        %v526 = vpack.c.b16 %v490, %v489
        %v527 = vpack.c.b16 %v492, %v491
        %v528 = vpack.c.b16 %v494, %v493
        %v529 = vpack.c.b16 %v496, %v495
        %v530 = vpack.c.b16 %v498, %v497
        %563 = vmatpush.bf16.msra.mxu0 %v506
        %564 = vmatpush.bf16.msra.mxu0 %v505
        %565 = vmatpush.bf16.msra.mxu0 %v504
        %566 = vmatpush.bf16.msra.mxu0 %v503
        %567 = vmatpush.bf16.msra.mxu0 %v502
        %568 = vmatpush.bf16.msra.mxu0 %v501
        %569 = vmatpush.bf16.msra.mxu0 %v500
        %570 = vmatpush.bf16.msra.mxu0 %v499
        %571 = vmatmul.bf16.gmra.mxu0 %v363
        %v572 = vpop.f32.mrf.mxu0
        %v573 = vadd.f32 0.0, %v572
        %v574 = vpop.f32.mrf.mxu0
        %575 = vdwg.mxu0
        %576 = vmatpush.bf16.msra.mxu0 %v514
        %577 = vmatpush.bf16.msra.mxu0 %v513
        %578 = vmatpush.bf16.msra.mxu0 %v512
        %579 = vmatpush.bf16.msra.mxu0 %v511
        %580 = vmatpush.bf16.msra.mxu0 %v510
        %581 = vmatpush.bf16.msra.mxu0 %v509
        %582 = vmatpush.bf16.msra.mxu0 %v508
        %583 = vmatpush.bf16.msra.mxu0 %v507
        %584 = vmatmul.bf16.gmra.mxu0 %v364
        %v585 = vpop.f32.mrf.mxu0
        %v586 = vadd.f32 %v573, %v585
        %v587 = vpop.f32.mrf.mxu0
        %588 = vdwg.mxu0
        %589 = vmatpush.bf16.msra.mxu0 %v522
        %590 = vmatpush.bf16.msra.mxu0 %v521
        %591 = vmatpush.bf16.msra.mxu0 %v520
        %592 = vmatpush.bf16.msra.mxu0 %v519
        %593 = vmatpush.bf16.msra.mxu0 %v518
        %594 = vmatpush.bf16.msra.mxu0 %v517
        %595 = vmatpush.bf16.msra.mxu0 %v516
        %596 = vmatpush.bf16.msra.mxu0 %v515
        %597 = vmatmul.bf16.gmra.mxu0 %v365
        %v598 = vpop.f32.mrf.mxu0
        %v599 = vadd.f32 %v586, %v598
        %v600 = vpop.f32.mrf.mxu0
        %601 = vdwg.mxu0
        %602 = vmatpush.bf16.msra.mxu0 %v530
        %603 = vmatpush.bf16.msra.mxu0 %v529
        %604 = vmatpush.bf16.msra.mxu0 %v528
        %605 = vmatpush.bf16.msra.mxu0 %v527
        %606 = vmatpush.bf16.msra.mxu0 %v526
        %607 = vmatpush.bf16.msra.mxu0 %v525
        %608 = vmatpush.bf16.msra.mxu0 %v524
        %609 = vmatpush.bf16.msra.mxu0 %v523
        %610 = vmatmul.bf16.gmra.mxu0 %v366
        %v611 = vpop.f32.mrf.mxu0
        %v612 = vadd.f32 %v599, %v611
        %v613 = vpop.f32.mrf.mxu0
        %614 = vdwg.mxu0
        %v615 = vadd.f32 %v295, %v612
        %616 = vst [vmem:[#allocation2] sm:$0x3] %v615
        %p617 = scmp.eq.s32.totalorder %s23, 1
        // Predicated region
        $region45: #{forward.3} parent=35 // pred_check
          %p618 = pneg %p617
        $region46: #{forward.3} parent=35 // pred_check_branch
          %620 = sbr.rel (%p618) target = $region48
        $region47: #{forward.3} parent=35 // pred_region
          %v621 = vld [vmem:[#allocation2] sm:$0x3]
          %v622 = vld [vmem:[%s279] sm:$0x1]
          %v624 = vperm.slane %v622, 0
          %v626 = vadd.f32 %v621, %v624
          %v627 = vmax.f32 %v626, 0.0
          %v628 = vld [vmem:[%s284] sm:$0xff]
          %v629 = vld [vmem:[%s284 + $0x8] sm:$0xff]
          %v630 = vld [vmem:[%s284 + $0x10] sm:$0xff]
          %v631 = vld [vmem:[%s284 + $0x18] sm:$0xff]
          %v632 = vld [vmem:[%s284 + $0x20] sm:$0xff]
          %v633 = vld [vmem:[%s284 + $0x28] sm:$0xff]
          %v634 = vld [vmem:[%s284 + $0x30] sm:$0xff]
          %v635 = vld [vmem:[%s284 + $0x38] sm:$0xff]
          %v636 = vld [vmem:[%s284 + $0x40] sm:$0xff]
          %v637 = vld [vmem:[%s284 + $0x48] sm:$0xff]
          %v638 = vld [vmem:[%s284 + $0x50] sm:$0xff]
          %v639 = vld [vmem:[%s284 + $0x58] sm:$0xff]
          %v640 = vld [vmem:[%s284 + $0x60] sm:$0xff]
          %v641 = vld [vmem:[%s284 + $0x68] sm:$0xff]
          %v642 = vld [vmem:[%s284 + $0x70] sm:$0xff]
          %v643 = vld [vmem:[%s284 + $0x78] sm:$0xff]
          %644 = vmatpush.msra.mxu0 %v643
          %645 = vmatpush.msra.mxu0 %v642
          %646 = vmatpush.msra.mxu0 %v641
          %647 = vmatpush.msra.mxu0 %v640
          %648 = vmatpush.msra.mxu0 %v639
          %649 = vmatpush.msra.mxu0 %v638
          %650 = vmatpush.msra.mxu0 %v637
          %651 = vmatpush.msra.mxu0 %v636
          %652 = vmatpush.msra.mxu0 %v635
          %653 = vmatpush.msra.mxu0 %v634
          %654 = vmatpush.msra.mxu0 %v633
          %655 = vmatpush.msra.mxu0 %v632
          %656 = vmatpush.msra.mxu0 %v631
          %657 = vmatpush.msra.mxu0 %v630
          %658 = vmatpush.msra.mxu0 %v629
          %659 = vmatpush.msra.mxu0 %v628
          %660 = vmatmul.f32.gmra.mxu0 %v627
          %v661 = vpop.f32.mrf.mxu0
          %v662 = vadd.f32 0.0, %v661
          %663 = vdwg.mxu0
          %vm664 = vcmask 17408
          %665 = vst.msk [vmem:[%s289] sm:$0x3] %vm664, %v662
        $region48: #{forward.3} parent=35 // pred_fallthru
          _
        %p666 = scmp.lt.s32.totalorder %s22, 1
        %s667 = scalar_select %p666, %s22, 1
        %s668 = smul.addr %s667, 2
        %s669 = scalar_lea.vmem %s4, %s668
        // Predicated region
        $region49: #{forward.3} parent=35 // pred_check
          %p670 = pneg %p154
        $region50: #{forward.3} parent=35 // pred_check_branch
          %672 = sbr.rel (%p670) target = $region52
        $region51: #{forward.3} parent=35 // pred_region
          _
        $region52: #{forward.3} parent=35 // pred_fallthru
          _
      $region36: #{forward.3} parent=5 // pred_fallthru
        _
      %p673 = scmp.le.s32.totalorder 2, %s13
      // Predicated region
      $region53: #{forward.3} parent=5 // pred_check
        %p674 = pneg %p673
      $region54: #{forward.3} parent=5 // pred_check_branch
        %676 = sbr.rel (%p674) target = $region56
      $region55: #{forward.3} parent=5 // pred_region
        %s677 = ssub.s32 %s13, 2
        // Predicated region
        $region57: #{forward.3} parent=55 // pred_check
          %p678 = pneg %p160
        $region58: #{forward.3} parent=55 // pred_check_branch
          %680 = sbr.rel (%p678) target = $region60
        $region59: #{forward.3} parent=55 // pred_region
          %p681 = scmp.lt.s32.totalorder %s24, 1
          %s682 = scalar_select %p681, %s24, 1
          %s683 = smul.addr %s682, 2
          %s684 = scalar_lea.vmem %s4, %s683
        $region60: #{forward.3} parent=55 // pred_fallthru
          _
      $region56: #{forward.3} parent=5 // pred_fallthru
        _
    $region6: #{forward.3} parent=1 // loop_footer
      %s17 = sadd.s32 1, %s13
    $region7: #{forward.3} parent=1 // loop_footer_branch
      %12 = sbr.rel target = $region3
    $region8: #{forward.3} parent=1 // loop_exit
      _
    %685 = vsyncpa [#allocation4], 1
    %s686 = scalar_lea.sflag [#allocation4], 1
    %687 = vsyncpa %s686, 1

</llo_original>
